<compile_context>
chip_gen: v7x
topology: tpu7x:2x2x1
jax: 0.10.0
libtpu: 0.0.40
codegen_flags: <defaults>
</compile_context>

<pallas_src>
import functools

import jax
import jax.numpy as jnp
from jax.experimental import pallas as pl
from jax.experimental.pallas import tpu as pltpu


def _batchnorm_over_n_kernel(x_ref, o_ref, *, inv_nm1, eps):
    # x_ref: [N, tile] block of the flattened input; the reduction axis (N)
    # is fully resident in every block, so each block is independent.
    x = x_ref[...].astype(jnp.float32)
    mean = jnp.mean(x, axis=0, keepdims=True)             # reduce over batch dim
    diff = x - mean
    # Unbiased variance (PyTorch torch.Tensor.var default: correction=1).
    # 1/(N-1) is a precomputed constant; divide+sqrt becomes rsqrt (EUP slot,
    # off the VALU critical path).
    var = jnp.sum(diff * diff, axis=0, keepdims=True) * jnp.float32(inv_nm1)
    o_ref[...] = (diff * jax.lax.rsqrt(var + jnp.float32(eps))).astype(o_ref.dtype)


def _sublane_rows(n, dtype):
    """Rows an [n, *] VMEM tile actually occupies (sub-32-bit dtypes pack 2x/4x)."""
    itemsize = jnp.dtype(dtype).itemsize
    mult = 8 * max(1, 4 // itemsize)      # 8 rows f32, 16 bf16, 32 int8/fp8
    return max(mult, ((n + mult - 1) // mult) * mult)


def _choose_tile(N, M, dtype):
    """Pick the lane-tile width for the flattened [N, M] view."""
    itemsize = jnp.dtype(dtype).itemsize
    n_pad = _sublane_rows(N, dtype)
    m128 = pl.cdiv(M, 128) * 128

    if M <= 128:
        # Tiny feature count: one block equal to the full array dims.
        return M

    # Per-lane VMEM footprint of one block:
    #   in + out, each double-buffered              -> 4 * itemsize bytes
    #   ~3 block-sized f32 temporaries in the body  -> 12 bytes
    bytes_per_lane = n_pad * (4 * itemsize + 12)
    vmem_cap = max(128, (24 << 20) // bytes_per_lane)   # stay well under 64 MiB (v7x)

    # Target ~2 MiB of input per block: large enough to amortize the ~0.35 us
    # per-grid-step overhead even at v5e bandwidth, small enough to keep the
    # grid deep.
    target = max(128, (2 << 20) // (n_pad * itemsize))

    # Keep the grid >= 8 steps whenever M allows (pipeline depth + 2-TC split).
    depth_cap = max(128, m128 // 8)

    tile = min(target, vmem_cap, depth_cap, m128)
    tile = max(128, (tile // 128) * 128)

    # Prefer an even grid so v7x's two TensorCores split the work evenly.
    if pl.cdiv(M, tile) > 2 and pl.cdiv(M, tile) % 2 == 1:
        for cand in range(tile - 128, max(128, tile // 2) - 1, -128):
            if pl.cdiv(M, cand) % 2 == 0:
                tile = cand
                break
    return tile


def layernorm_forward(x, eps=1e-5):
    """Pallas implementation of the module's forward pass. x: [N, C, H, W]."""
    N, C, H, W = x.shape
    assert N >= 2, "unbiased variance over the batch dim needs N >= 2"
    M = C * H * W
    x2 = x.reshape(N, M)

    dtype = x.dtype
    itemsize = jnp.dtype(dtype).itemsize
    n_pad = _sublane_rows(N, dtype)
    tile = _choose_tile(N, M, dtype)
    grid = (pl.cdiv(M, tile),)

    # Scoped VMEM: 2x double-buffered in/out blocks + ~3 f32 block temporaries
    # + headroom; clamp comfortably under v7x's 64 MiB physical VMEM per TC.
    block_io = n_pad * tile * itemsize
    block_f32 = n_pad * tile * 4
    vmem_limit = int(min(48 << 20,
                         max(16 << 20, 4 * block_io + 3 * block_f32 + (2 << 20))))

    kernel = functools.partial(
        _batchnorm_over_n_kernel, inv_nm1=1.0 / (N - 1), eps=eps)

    out = pl.pallas_call(
        kernel,
        out_shape=jax.ShapeDtypeStruct((N, M), dtype),
        grid=grid,
        in_specs=[pl.BlockSpec((N, tile), lambda j: (0, j))],
        out_specs=pl.BlockSpec((N, tile), lambda j: (0, j)),
        compiler_params=pltpu.CompilerParams(
            dimension_semantics=("parallel",),
            vmem_limit_bytes=vmem_limit),
    )(x2)
    return out.reshape(N, C, H, W)


def _reference(x, eps=1e-5):
    # Pure-JAX reference mirroring the PyTorch module exactly.
    mean = jnp.mean(x, axis=0, keepdims=True)
    var = jnp.var(x, axis=0, keepdims=True, ddof=1)  # unbiased, like torch
    return (x - mean) / jnp.sqrt(var + eps)


if __name__ == "__main__":
    key = jax.random.PRNGKey(0)
    # Module has no learnable parameters (only eps) — nothing to initialize.
    x = jax.random.normal(key, (2, 4, 16, 16), dtype=jnp.float32)

    y = layernorm_forward(x, eps=1e-5)
    y = jax.block_until_ready(y)
    y_ref = _reference(x, eps=1e-5)
    assert y.shape == x.shape and y.dtype == x.dtype
    assert jnp.allclose(y, y_ref, atol=1e-5, rtol=1e-5)

    # Also exercise the non-128-multiple feature path (partial, masked last block).
    key2 = jax.random.PRNGKey(0)
    x_odd = jax.random.normal(key2, (4, 3, 10, 10), dtype=jnp.float32)  # M = 300
    y_odd = jax.block_until_ready(layernorm_forward(x_odd, eps=1e-5))
    assert jnp.allclose(y_odd, _reference(x_odd, eps=1e-5), atol=1e-5, rtol=1e-5)

    print("KERNEL_OK")
</pallas_src>

<mosaic_0001>
module attributes {stable_mosaic.version = 11 : i64} {
  func.func @_batchnorm_over_n_kernel(%arg0: i32, %arg1: memref<2x128xf32, #tpu.memory_space<vmem>>, %arg2: memref<2x128xf32, #tpu.memory_space<vmem>>) attributes {dimension_semantics = [#tpu.dimension_semantics<parallel>], iteration_bounds = array<i64: 8>, scalar_prefetch = 0 : i64, scratch_operands = 0 : i64, tpu.core_type = #tpu.core_type<tc>, window_params = [{transform_indices = @transform_0, window_bounds = array<i64: 2, 128>}, {transform_indices = @transform_1, window_bounds = array<i64: 2, 128>}]} {
    %c0 = arith.constant 0 : index
    %c0_0 = arith.constant 0 : index
    %0 = vector.load %arg1[%c0, %c0_0] : memref<2x128xf32, #tpu.memory_space<vmem>>, vector<2x128xf32>
    %cst = arith.constant dense<0.000000e+00> : vector<128xf32>
    %1 = vector.multi_reduction <add>, %0, %cst [0] : vector<2x128xf32> to vector<128xf32>
    %2 = vector.shape_cast %1 : vector<128xf32> to vector<1x128xf32>
    %cst_1 = arith.constant 2.000000e+00 : f32
    %3 = vector.broadcast %cst_1 : f32 to vector<1x128xf32>
    %4 = arith.divf %2, %3 : vector<1x128xf32>
    %5 = vector.broadcast %4 : vector<1x128xf32> to vector<2x128xf32>
    %6 = arith.subf %0, %5 : vector<2x128xf32>
    %7 = arith.mulf %6, %6 : vector<2x128xf32>
    %cst_2 = arith.constant dense<0.000000e+00> : vector<128xf32>
    %8 = vector.multi_reduction <add>, %7, %cst_2 [0] : vector<2x128xf32> to vector<128xf32>
    %9 = vector.shape_cast %8 : vector<128xf32> to vector<1x128xf32>
    %cst_3 = arith.constant 1.000000e+00 : f32
    %10 = vector.broadcast %cst_3 : f32 to vector<1x128xf32>
    %11 = arith.mulf %9, %10 : vector<1x128xf32>
    %cst_4 = arith.constant 9.99999974E-6 : f32
    %12 = vector.broadcast %cst_4 : f32 to vector<1x128xf32>
    %13 = arith.addf %11, %12 : vector<1x128xf32>
    %14 = math.rsqrt %13 : vector<1x128xf32>
    %15 = vector.broadcast %14 : vector<1x128xf32> to vector<2x128xf32>
    %16 = arith.mulf %6, %15 : vector<2x128xf32>
    %c0_5 = arith.constant 0 : index
    %c0_6 = arith.constant 0 : index
    %17 = vector.load %arg2[%c0_5, %c0_6] : memref<2x128xf32, #tpu.memory_space<vmem>>, vector<2x128xf32>
    tpu.vector_store %arg2[%c0_5, %c0_6], %16 {strides = array<i32>} : memref<2x128xf32, #tpu.memory_space<vmem>>, vector<2x128xf32>,
    return
  }
  func.func @transform_0(%arg0: i32) -> (i32, i32) {
    %c0_i32 = arith.constant 0 : i32
    %c0_i32_0 = arith.constant 0 : i32
    return %c0_i32, %arg0 : i32, i32
  }
  func.func @transform_1(%arg0: i32) -> (i32, i32) {
    %c0_i32 = arith.constant 0 : i32
    %c0_i32_0 = arith.constant 0 : i32
    return %c0_i32, %arg0 : i32, i32
  }
}

</mosaic_0001>

<llo_original>
// kernel: tpu_custom_call.1
$region0: #{tpu_custom_call.1}
  #allocation0 [shape = 'u32[]', space=smem, size = 0x4, offset = 0x4, fixed_abs, tag = 'smem constant byte address 0x4 - core index']
  #allocation1 [shape = 'u32[144,128]{1,0:T(1,128)}', space=vmem, size = 0x12000, scoped, tag = 'internal scratch']
  %s0 = inlined_call_operand.hbm [shape: f32[2,1024], index: 0, kind: input, shape index: {}]
  %s1 = inlined_call_operand.hbm [shape: f32[2,1024], index: 1, kind: output, shape index: {}]
  %s2 = sld [smem:[#allocation0]]
  $region41: #{tpu_custom_call.1} parent=0
    _
  %s4 = ssub.s32 1, %s2
  %s5 = scalar_select 0, %s4, %s2
  $region1: #{tpu_custom_call.1} parent=0
    #allocation2 [shape = 'u8[2048]{0}', space=vmem, size = 0x800, scoped, tag = 'input window, operand 0']
    #allocation3 [shape = 's32[2]{0}', space=sflag, size = 0x8, scoped, tag = 'scoped memory for tpu_custom_call.1']
    #allocation4 [shape = 's32[2]{0}', space=sflag, size = 0x8, scoped, tag = 'scoped memory for tpu_custom_call.1']
    #allocation5 [shape = 'u8[2048]{0}', space=vmem, size = 0x800, scoped, tag = 'output window, operand 0']
    %6 = vsyncpa [#allocation3], 0
    %s7 = scalar_lea.sflag [#allocation3], 1
    %8 = vsyncpa %s7, 0
    %9 = vsyncpa [#allocation4], 0
    %s10 = scalar_lea.sflag [#allocation4], 1
    %11 = vsyncpa %s10, 0
    loop: start=0, step=1, limit=10
    $region2: #{tpu_custom_call.1} parent=1 // loop_pre_header
      _
    $region3: #{tpu_custom_call.1} parent=1 // loop_header
      %s13 = sphi 0, %s17
      %p14 = scmp.ge.s32.totalorder %s13, 10
      %s23 = sphi 0, %s25
      %s26 = sphi 0, %s23
      %s27 = sphi 0, %s26
      %s43 = sphi 0, %s27
      %s49 = sphi 0, %s51
      %s52 = sphi 0, %s49
      %s53 = sphi 0, %s52
      %s69 = sphi 0, %s53
    $region4: #{tpu_custom_call.1} parent=1 // loop_header_branch
      %16 = sbr.rel (%p14) target = $region8
    $region5: #{tpu_custom_call.1} parent=1 // loop_body
      %s18 = ssub.s32 %s13, 1
      %s19 = ssub.s32 %s13, 2
      %s20 = sadd.s32 %s13, 1
      %s21 = ssub.s32 %s13, %s20
      %p22 = scmp.eq.s32.totalorder %s21, 0
      %s24 = sadd.s32 %s23, 1
      %s25 = scalar_select %p22, %s23, %s24
      %p28 = pneg %p22
      %p29 = scmp.eq.s32.totalorder %s13, 7
      %p30 = por %p28, %p29
      %p31 = scmp.ne.s32.totalorder %s23, %s26
      %p32 = scmp.eq.s32.totalorder %s13, 0
      %p33 = por %p31, %p32
      %p34 = scmp.ne.s32.totalorder %s23, %s26
      %p35 = scmp.eq.s32.totalorder %s18, 7
      %p36 = por %p34, %p35
      %p37 = scmp.ne.s32.totalorder %s26, %s27
      %p38 = scmp.eq.s32.totalorder %s18, 0
      %p39 = por %p37, %p38
      %p40 = scmp.ne.s32.totalorder %s26, %s27
      %p41 = scmp.eq.s32.totalorder %s19, 7
      %p42 = por %p40, %p41
      %p44 = scmp.ne.s32.totalorder %s27, %s43
      %p45 = scmp.eq.s32.totalorder %s19, 0
      %p46 = por %p44, %p45
      %s47 = ssub.s32 %s13, %s20
      %p48 = scmp.eq.s32.totalorder %s47, 0
      %s50 = sadd.s32 %s49, 1
      %s51 = scalar_select %p48, %s49, %s50
      %p54 = pneg %p48
      %p55 = scmp.eq.s32.totalorder %s13, 7
      %p56 = por %p54, %p55
      %p57 = scmp.ne.s32.totalorder %s49, %s52
      %p58 = scmp.eq.s32.totalorder %s13, 0
      %p59 = por %p57, %p58
      %p60 = scmp.ne.s32.totalorder %s49, %s52
      %p61 = scmp.eq.s32.totalorder %s18, 7
      %p62 = por %p60, %p61
      %p63 = scmp.ne.s32.totalorder %s52, %s53
      %p64 = scmp.eq.s32.totalorder %s18, 0
      %p65 = por %p63, %p64
      %p66 = scmp.ne.s32.totalorder %s52, %s53
      %p67 = scmp.eq.s32.totalorder %s19, 7
      %p68 = por %p66, %p67
      %p70 = scmp.ne.s32.totalorder %s53, %s69
      %p71 = scmp.eq.s32.totalorder %s19, 0
      %p72 = por %p70, %p71
      %p73 = scmp.le.s32.totalorder 1, %s13
      %p74 = scmp.lt.s32.totalorder %s13, 9
      %p75 = pnand %p73, %p74
      %p76 = pneg %p75
      // Predicated region
      $region9: #{tpu_custom_call.1} parent=5 // pred_check
        _
      $region10: #{tpu_custom_call.1} parent=5 // pred_check_branch
        %78 = sbr.rel (%p75) target = $region12
      $region11: #{tpu_custom_call.1} parent=5 // pred_region
        %s79 = ssub.s32 %s13, 1
      $region12: #{tpu_custom_call.1} parent=5 // pred_fallthru
        _
      %p80 = scmp.lt.s32.totalorder %s13, 8
      // Predicated region
      $region13: #{tpu_custom_call.1} parent=5 // pred_check
        %p81 = pneg %p80
      $region14: #{tpu_custom_call.1} parent=5 // pred_check_branch
        %83 = sbr.rel (%p81) target = $region16
      $region15: #{tpu_custom_call.1} parent=5 // pred_region
        // Predicated region
        $region17: #{tpu_custom_call.1} parent=15 // pred_check
          %p84 = pneg %p33
        $region18: #{tpu_custom_call.1} parent=15 // pred_check_branch
          %86 = sbr.rel (%p84) target = $region20
        $region19: #{tpu_custom_call.1} parent=15 // pred_region
          %s87 = sand.u32 %s23, 1
          %s88 = scalar_lea.sflag [#allocation3], %s87
          %s89 = sand.u32 %s23, 1
          %s90 = smul.addr %s89, 2
          %s91 = scalar_lea.vmem [#allocation2], %s90
          %s93 = ssub.s32 32, 32
          %94 = vsyncadd %s88, %s93
          %s95 = smul.addr %s13, 32
          %s96 = scalar_lea.hbm %s0, %s95
          %s98 = sshll.u32 %s91, 4
          %s99 = int_to_ptr.vmem [resolvable:$true] %s98
          %101 = dma.hbm_to_vmem [thread:$0]  %s96, 32, %s99, %s88
        $region20: #{tpu_custom_call.1} parent=15 // pred_fallthru
          _
      $region16: #{tpu_custom_call.1} parent=5 // pred_fallthru
        _
      %p102 = scmp.le.s32.totalorder 1, %s13
      %p103 = scmp.lt.s32.totalorder %s13, 9
      %p104 = pnand %p102, %p103
      %p105 = pneg %p104
      // Predicated region
      $region21: #{tpu_custom_call.1} parent=5 // pred_check
        _
      $region22: #{tpu_custom_call.1} parent=5 // pred_check_branch
        %107 = sbr.rel (%p104) target = $region24
      $region23: #{tpu_custom_call.1} parent=5 // pred_region
        %s108 = ssub.s32 %s13, 1
        %s109 = sand.u32 %s26, 1
        %s110 = scalar_lea.sflag [#allocation3], %s109
        %s111 = sand.u32 %s26, 1
        %s112 = smul.addr %s111, 2
        %s113 = scalar_lea.vmem [#allocation2], %s112
        // Predicated region
        $region25: #{tpu_custom_call.1} parent=23 // pred_check
          %p114 = pneg %p39
        $region26: #{tpu_custom_call.1} parent=23 // pred_check_branch
          %116 = sbr.rel (%p114) target = $region28
        $region27: #{tpu_custom_call.1} parent=23 // pred_region
          %117 = dma.done %s110, 32
        $region28: #{tpu_custom_call.1} parent=23 // pred_fallthru
          _
        %s118 = sand.u32 %s26, 1
        %s119 = scalar_lea.sflag [#allocation3], %s118
        %s120 = sand.u32 %s26, 1
        %s121 = smul.addr %s120, 2
        %s122 = scalar_lea.vmem [#allocation2], %s121
        %p123 = pneg %p39
        %p124 = pneg %p36
        %p125 = pneg %p65
        %p126 = pneg %p62
        %s127 = sand.u32 %s52, 1
        %s128 = scalar_lea.sflag [#allocation4], %s127
        %s129 = sand.u32 %s52, 1
        %s130 = smul.addr %s129, 2
        %s131 = scalar_lea.vmem [#allocation5], %s130
        %v132 = vld [vmem:[%s113] sm:$0x3]
        %vm133 = vcmask 1041408
        %v134 = vsel %vm133, %v132, 0.0
        %v135 = vrot.slane %v134, 4
        %v136 = vadd.f32 %v134, %v135
        %v137 = vrot.slane %v136, 2
        %v138 = vadd.f32 %v136, %v137
        %v139 = vrot.slane %v138, 1
        %v140 = vadd.f32 %v138, %v139
        %v141 = vrcp.pop 2.0
        %v142 = vmul.f32 %v140, %v141
        %v143 = vsub.f32 %v132, %v142
        %v144 = vmul.f32 %v143, %v143
        %v145 = vsel %vm133, %v144, 0.0
        %v146 = vrot.slane %v145, 4
        %v147 = vadd.f32 %v145, %v146
        %v148 = vrot.slane %v147, 2
        %v149 = vadd.f32 %v147, %v148
        %v150 = vrot.slane %v149, 1
        %v151 = vadd.f32 %v149, %v150
        %v152 = vadd.f32 %v151, 1e-05
        %v153 = vrsqrt.pop %v152
        %v154 = vmul.f32 %v143, %v153
        %155 = vst [vmem:[%s131] sm:$0x3] %v154
        %s156 = sand.u32 %s52, 1
        %s157 = scalar_lea.sflag [#allocation4], %s156
        %s158 = sand.u32 %s52, 1
        %s159 = smul.addr %s158, 2
        %s160 = scalar_lea.vmem [#allocation5], %s159
        // Predicated region
        $region29: #{tpu_custom_call.1} parent=23 // pred_check
          %p161 = pneg %p62
        $region30: #{tpu_custom_call.1} parent=23 // pred_check_branch
          %163 = sbr.rel (%p161) target = $region32
        $region31: #{tpu_custom_call.1} parent=23 // pred_region
          %s165 = ssub.s32 32, 32
          %166 = vsyncadd %s157, %s165
          %s167 = smul.addr %s18, 32
          %s168 = scalar_lea.hbm %s1, %s167
          %s170 = sshll.u32 %s160, 4
          %s171 = int_to_ptr.vmem [resolvable:$true] %s170
          %173 = dma.vmem_to_hbm [thread:$0]  %s171, 32, %s168, %s157
        $region32: #{tpu_custom_call.1} parent=23 // pred_fallthru
          _
      $region24: #{tpu_custom_call.1} parent=5 // pred_fallthru
        _
      %p174 = scmp.le.s32.totalorder 2, %s13
      // Predicated region
      $region33: #{tpu_custom_call.1} parent=5 // pred_check
        %p175 = pneg %p174
      $region34: #{tpu_custom_call.1} parent=5 // pred_check_branch
        %177 = sbr.rel (%p175) target = $region36
      $region35: #{tpu_custom_call.1} parent=5 // pred_region
        %s178 = ssub.s32 %s13, 2
        // Predicated region
        $region37: #{tpu_custom_call.1} parent=35 // pred_check
          %p179 = pneg %p68
        $region38: #{tpu_custom_call.1} parent=35 // pred_check_branch
          %181 = sbr.rel (%p179) target = $region40
        $region39: #{tpu_custom_call.1} parent=35 // pred_region
          %s182 = sand.u32 %s53, 1
          %s183 = scalar_lea.sflag [#allocation4], %s182
          %s184 = sand.u32 %s53, 1
          %s185 = smul.addr %s184, 2
          %s186 = scalar_lea.vmem [#allocation5], %s185
          %187 = dma.done %s183, 32
        $region40: #{tpu_custom_call.1} parent=35 // pred_fallthru
          _
      $region36: #{tpu_custom_call.1} parent=5 // pred_fallthru
        _
    $region6: #{tpu_custom_call.1} parent=1 // loop_footer
      %s17 = sadd.s32 1, %s13
    $region7: #{tpu_custom_call.1} parent=1 // loop_footer_branch
      %12 = sbr.rel target = $region3
    $region8: #{tpu_custom_call.1} parent=1 // loop_exit
      _
    %188 = vsyncpa [#allocation3], 1
    %s189 = scalar_lea.sflag [#allocation3], 1
    %190 = vsyncpa %s189, 1
    %191 = vsyncpa [#allocation4], 1
    %s192 = scalar_lea.sflag [#allocation4], 1
    %193 = vsyncpa %s192, 1

</llo_original>
